<compile_context>
chip_gen: v7x
topology: tpu7x:2x2x1
jax: 0.10.0
libtpu: 0.0.40
codegen_flags: <defaults>
</compile_context>

<pallas_src>
import functools

import jax
import jax.numpy as jnp
from jax.experimental import pallas as pl
from jax.experimental.pallas import tpu as pltpu

_LANES = 128
_SUBLANES = 8


def _focal_loss_kernel(pred_ref, target_ref, partial_ref, *, gamma, alpha,
                       tile_rows, total, mask_tail, binary_target):
    p = pred_ref[...].astype(jnp.float32)
    t = target_ref[...].astype(jnp.float32)

    if binary_target:
        # Fast path for exactly-binary targets: one log, where-based pt/alpha.
        t_pos = t > 0.5
        p_t = jnp.where(t_pos, p, 1.0 - p)                 # == pt
        one_minus_pt = 1.0 - p_t
        alpha_w = jnp.where(t_pos, alpha, 1.0 - alpha)
        bce = -jnp.maximum(jnp.log(p_t), -100.0)
    else:
        # 1 - pt   where   pt = p*t + (1-p)*(1-t)
        one_minus_pt = p + t - 2.0 * p * t
        # alpha*t + (1-alpha)*(1-t)  ==  (1-alpha) + (2*alpha - 1)*t
        alpha_w = (1.0 - alpha) + (2.0 * alpha - 1.0) * t
        log_p = jnp.maximum(jnp.log(p), -100.0)
        log_1mp = jnp.maximum(jnp.log(1.0 - p), -100.0)
        bce = -(t * log_p + (1.0 - t) * log_1mp)

    # (1-pt)^gamma — strength-reduce small integer exponents to multiplies.
    if float(gamma) == float(int(gamma)) and 0 <= int(gamma) <= 4:
        g = int(gamma)
        if g == 0:
            mod = jnp.ones_like(one_minus_pt)
        else:
            mod = one_minus_pt
            for _ in range(g - 1):
                mod = mod * one_minus_pt
    else:
        # Clamp: p,t near 1 can make one_minus_pt round slightly negative.
        mod = jnp.power(jnp.maximum(one_minus_pt, 0.0), gamma)

    loss = bce * alpha_w * mod                              # (tile_rows, 128)

    if mask_tail:
        # All invalid elements (zero-padding to the (8,128) unit and the
        # unspecified out-of-bounds rows of a partial last block) live in the
        # last grid block.  Mask them before the partial sum.  Decompose the
        # element index into (row, lane) so we stay in int32 for huge inputs.
        full_rows = total // _LANES          # fully-valid rows
        tail_lanes = total % _LANES          # valid lanes in row `full_rows`
        row_ids = (pl.program_id(0) * tile_rows
                   + jax.lax.broadcasted_iota(jnp.int32, loss.shape, 0))
        lane_ids = jax.lax.broadcasted_iota(jnp.int32, loss.shape, 1)
        valid = (row_ids < full_rows) | ((row_ids == full_rows)
                                         & (lane_ids < tail_lanes))
        loss = jnp.where(valid, loss, 0.0)

    # Fold sublane-tile groups onto one (8, 128) slab (pure VALU adds; no
    # cross-lane XLU reduce and no scalar RMW in the steady state).
    partial_ref[...] = loss.reshape(tile_rows // _SUBLANES,
                                    _SUBLANES, _LANES).sum(axis=0)


def focal_loss(pred, target, *, gamma=2.0, alpha=0.25, block_rows=8192,
               binary_target=False):
    """Focal loss with 'mean' reduction, computed in a Pallas TPU kernel.

    pred/target: same shape (e.g. (N, C)); pred are probabilities in (0, 1).
    Inputs are streamed at their native dtype (f32 / bf16 / int targets);
    the kernel upcasts to f32 for the math.
    """
    assert pred.shape == target.shape
    total = pred.size                    # true element count for the mean

    p_flat = jnp.ravel(pred)
    t_flat = jnp.ravel(target)

    # Minimal pad (< 1024 elements) to a lane/sublane-aligned (m, 128) layout.
    # Padded elements are masked out inside the kernel, so their value does
    # not matter for correctness.
    pad_unit = _LANES * _SUBLANES
    padded = ((total + pad_unit - 1) // pad_unit) * pad_unit
    if padded != total:
        p_flat = jnp.pad(p_flat, (0, padded - total))
        t_flat = jnp.pad(t_flat, (0, padded - total))

    m = padded // _LANES                 # rows of the (M, 128) layout (mult of 8)

    # Fixed tile size: block_rows (rounded to a multiple of 32 so bf16/int8
    # min-tiles are respected) or the whole array if smaller.  A partial last
    # block is handled by in-kernel masking — never shrink the tile.
    block_rows = max(32, (int(block_rows) // 32) * 32)
    tile_rows = m if m <= block_rows else block_rows
    num_blocks = pl.cdiv(m, tile_rows)
    mask_tail = (num_blocks * tile_rows * _LANES) != total

    p2 = p_flat.reshape(m, _LANES)
    t2 = t_flat.reshape(m, _LANES)

    kernel = functools.partial(
        _focal_loss_kernel, gamma=float(gamma), alpha=float(alpha),
        tile_rows=tile_rows, total=int(total), mask_tail=bool(mask_tail),
        binary_target=bool(binary_target))

    # 2 inputs x 2 pipeline buffers per block, plus headroom; >= 32 MiB so the
    # default 8192-row tile works on v5e's 16 MiB scoped default, capped well
    # inside v7x's 64 MiB physical VMEM.
    in_block_bytes = tile_rows * _LANES * (p2.dtype.itemsize
                                           + t2.dtype.itemsize)
    vmem_limit = int(min(max(32 << 20, 2 * in_block_bytes + (8 << 20)),
                         48 << 20))

    partials = pl.pallas_call(
        kernel,
        out_shape=jax.ShapeDtypeStruct((num_blocks * _SUBLANES, _LANES),
                                       jnp.float32),
        grid_spec=pltpu.PrefetchScalarGridSpec(
            num_scalar_prefetch=0,
            grid=(num_blocks,),
            in_specs=[
                pl.BlockSpec((tile_rows, _LANES), lambda i: (i, 0)),
                pl.BlockSpec((tile_rows, _LANES), lambda i: (i, 0)),
            ],
            out_specs=pl.BlockSpec((_SUBLANES, _LANES), lambda i: (i, 0)),
        ),
        compiler_params=pltpu.CompilerParams(
            # Independent per-block partials -> parallel (both TCs on v7x).
            dimension_semantics=("parallel",),
            vmem_limit_bytes=vmem_limit),
    )(p2, t2)

    # Tiny final tree-sum + 'mean' divide in plain JAX.
    return jnp.sum(partials) / float(total)


def focal_loss_ref(pred, target, *, gamma=2.0, alpha=0.25):
    """Pure-JAX reference (mirrors the PyTorch forward exactly)."""
    pred = pred.astype(jnp.float32)
    target = target.astype(jnp.float32)
    pt = pred * target + (1.0 - pred) * (1.0 - target)
    focal_w = (alpha * target + (1.0 - alpha) * (1.0 - target)) * \
        jnp.power(1.0 - pt, gamma)
    log_p = jnp.maximum(jnp.log(pred), -100.0)
    log_1mp = jnp.maximum(jnp.log(1.0 - pred), -100.0)
    bce = -(target * log_p + (1.0 - target) * log_1mp)
    return jnp.mean(bce * focal_w)


if __name__ == "__main__":
    key = jax.random.PRNGKey(0)
    k1, k2, k3, k4 = jax.random.split(key, 4)

    # (N, C): samples x classes, matching the module's spec.
    N, C = 16, 32
    pred = jax.nn.sigmoid(jax.random.normal(k1, (N, C), dtype=jnp.float32))
    target = (jax.random.uniform(k2, (N, C)) > 0.5).astype(jnp.float32)

    ref = focal_loss_ref(pred, target, gamma=2.0, alpha=0.25)

    # Default (soft-target) path.
    out = jax.block_until_ready(focal_loss(pred, target, gamma=2.0, alpha=0.25))
    assert jnp.allclose(out, ref, rtol=1e-5, atol=1e-6), (out, ref)

    # Binary-target fast path (targets here are exactly 0/1).
    out_bin = jax.block_until_ready(
        focal_loss(pred, target, gamma=2.0, alpha=0.25, binary_target=True))
    assert jnp.allclose(out_bin, ref, rtol=1e-5, atol=1e-6), (out_bin, ref)

    # Second, non-aligned shape with a small block override to exercise the
    # multi-block + ragged-tail masking path (partial last block).
    N2, C2 = 33, 128
    pred2 = jax.nn.sigmoid(jax.random.normal(k3, (N2, C2), dtype=jnp.float32))
    target2 = (jax.random.uniform(k4, (N2, C2)) > 0.5).astype(jnp.float32)
    ref2 = focal_loss_ref(pred2, target2, gamma=2.0, alpha=0.25)
    out2 = jax.block_until_ready(
        focal_loss(pred2, target2, gamma=2.0, alpha=0.25, block_rows=32))
    assert jnp.allclose(out2, ref2, rtol=1e-5, atol=1e-6), (out2, ref2)

    print("KERNEL_OK")
</pallas_src>

<mosaic_0001>
module attributes {stable_mosaic.version = 11 : i64} {
  func.func @_focal_loss_kernel(%arg0: i32, %arg1: memref<8x128xf32, #tpu.memory_space<vmem>>, %arg2: memref<8x128xf32, #tpu.memory_space<vmem>>, %arg3: memref<8x128xf32, #tpu.memory_space<vmem>>) attributes {dimension_semantics = [#tpu.dimension_semantics<parallel>], iteration_bounds = array<i64: 1>, scalar_prefetch = 0 : i64, scratch_operands = 0 : i64, tpu.core_type = #tpu.core_type<tc>, window_params = [{transform_indices = @transform_0, window_bounds = array<i64: 8, 128>}, {transform_indices = @transform_1, window_bounds = array<i64: 8, 128>}, {transform_indices = @transform_2, window_bounds = array<i64: 8, 128>}]} {
    %c0 = arith.constant 0 : index
    %c0_0 = arith.constant 0 : index
    %0 = vector.load %arg1[%c0, %c0_0] : memref<8x128xf32, #tpu.memory_space<vmem>>, vector<8x128xf32>
    %c0_1 = arith.constant 0 : index
    %c0_2 = arith.constant 0 : index
    %1 = vector.load %arg2[%c0_1, %c0_2] : memref<8x128xf32, #tpu.memory_space<vmem>>, vector<8x128xf32>
    %2 = arith.addf %0, %1 : vector<8x128xf32>
    %cst = arith.constant 2.000000e+00 : f32
    %3 = vector.broadcast %cst : f32 to vector<8x128xf32>
    %4 = arith.mulf %3, %0 : vector<8x128xf32>
    %5 = arith.mulf %4, %1 : vector<8x128xf32>
    %6 = arith.subf %2, %5 : vector<8x128xf32>
    %cst_3 = arith.constant -5.000000e-01 : f32
    %7 = vector.broadcast %cst_3 : f32 to vector<8x128xf32>
    %8 = arith.mulf %7, %1 : vector<8x128xf32>
    %cst_4 = arith.constant 7.500000e-01 : f32
    %9 = vector.broadcast %cst_4 : f32 to vector<8x128xf32>
    %10 = arith.addf %9, %8 : vector<8x128xf32>
    %11 = math.log %0 : vector<8x128xf32>
    %cst_5 = arith.constant -1.000000e+02 : f32
    %12 = vector.broadcast %cst_5 : f32 to vector<8x128xf32>
    %13 = arith.maximumf %11, %12 : vector<8x128xf32>
    %cst_6 = arith.constant 1.000000e+00 : f32
    %14 = vector.broadcast %cst_6 : f32 to vector<8x128xf32>
    %15 = arith.subf %14, %0 : vector<8x128xf32>
    %16 = math.log %15 : vector<8x128xf32>
    %cst_7 = arith.constant -1.000000e+02 : f32
    %17 = vector.broadcast %cst_7 : f32 to vector<8x128xf32>
    %18 = arith.maximumf %16, %17 : vector<8x128xf32>
    %19 = arith.mulf %1, %13 : vector<8x128xf32>
    %cst_8 = arith.constant 1.000000e+00 : f32
    %20 = vector.broadcast %cst_8 : f32 to vector<8x128xf32>
    %21 = arith.subf %20, %1 : vector<8x128xf32>
    %22 = arith.mulf %21, %18 : vector<8x128xf32>
    %23 = arith.addf %19, %22 : vector<8x128xf32>
    %cst_9 = arith.constant 0.000000e+00 : f32
    %24 = vector.broadcast %cst_9 : f32 to vector<8x128xf32>
    %25 = arith.subf %24, %23 : vector<8x128xf32>
    %26 = arith.mulf %6, %6 : vector<8x128xf32>
    %27 = arith.mulf %25, %10 : vector<8x128xf32>
    %28 = arith.mulf %27, %26 : vector<8x128xf32>
    %c8_i32 = arith.constant 8 : i32
    %29 = arith.muli %arg0, %c8_i32 : i32
    %30 = tpu.iota {dimensions = array<i32: 0>} : vector<8x128xi32>
    %31 = vector.broadcast %29 : i32 to vector<8x128xi32>
    %32 = arith.addi %31, %30 : vector<8x128xi32>
    %33 = tpu.iota {dimensions = array<i32: 1>} : vector<8x128xi32>
    %c4_i32 = arith.constant 4 : i32
    %34 = vector.broadcast %c4_i32 : i32 to vector<8x128xi32>
    %35 = arith.cmpi slt, %32, %34 : vector<8x128xi32>
    %c4_i32_10 = arith.constant 4 : i32
    %36 = vector.broadcast %c4_i32_10 : i32 to vector<8x128xi32>
    %37 = arith.cmpi eq, %32, %36 : vector<8x128xi32>
    %c0_i32 = arith.constant 0 : i32
    %38 = vector.broadcast %c0_i32 : i32 to vector<8x128xi32>
    %39 = arith.cmpi slt, %33, %38 : vector<8x128xi32>
    %40 = arith.andi %37, %39 : vector<8x128xi1>
    %41 = arith.ori %35, %40 : vector<8x128xi1>
    %cst_11 = arith.constant 0.000000e+00 : f32
    %42 = vector.broadcast %cst_11 : f32 to vector<8x128xf32>
    %43 = arith.select %41, %28, %42 : vector<8x128xi1>, vector<8x128xf32>
    %44 = vector.shape_cast %43 : vector<8x128xf32> to vector<1x8x128xf32>
    %cst_12 = arith.constant dense<0.000000e+00> : vector<8x128xf32>
    %45 = vector.multi_reduction <add>, %44, %cst_12 [0] : vector<1x8x128xf32> to vector<8x128xf32>
    %c0_13 = arith.constant 0 : index
    %c0_14 = arith.constant 0 : index
    %46 = vector.load %arg3[%c0_13, %c0_14] : memref<8x128xf32, #tpu.memory_space<vmem>>, vector<8x128xf32>
    tpu.vector_store %arg3[%c0_13, %c0_14], %45 {strides = array<i32>} : memref<8x128xf32, #tpu.memory_space<vmem>>, vector<8x128xf32>,
    return
  }
  func.func @transform_0(%arg0: i32) -> (i32, i32) {
    %c0_i32 = arith.constant 0 : i32
    %c0_i32_0 = arith.constant 0 : i32
    return %arg0, %c0_i32 : i32, i32
  }
  func.func @transform_1(%arg0: i32) -> (i32, i32) {
    %c0_i32 = arith.constant 0 : i32
    %c0_i32_0 = arith.constant 0 : i32
    return %arg0, %c0_i32 : i32, i32
  }
  func.func @transform_2(%arg0: i32) -> (i32, i32) {
    %c0_i32 = arith.constant 0 : i32
    %c0_i32_0 = arith.constant 0 : i32
    return %arg0, %c0_i32 : i32, i32
  }
}

</mosaic_0001>

<llo_original>
// kernel: tpu_custom_call.1
$region0: #{tpu_custom_call.1}
  #allocation0 [shape = 'u32[]', space=smem, size = 0x4, offset = 0x4, fixed_abs, tag = 'smem constant byte address 0x4 - core index']
  #allocation1 [shape = 'u32[144,128]{1,0:T(1,128)}', space=vmem, size = 0x12000, scoped, tag = 'internal scratch']
  %s0 = inlined_call_operand.hbm [shape: f32[8,128], index: 0, kind: input, shape index: {}]
  %s1 = inlined_call_operand.hbm [shape: f32[8,128], index: 1, kind: input, shape index: {}]
  %s2 = inlined_call_operand.hbm [shape: f32[8,128], index: 2, kind: output, shape index: {}]
  %s3 = sld [smem:[#allocation0]]
  $region26: #{tpu_custom_call.1} parent=0
    _
  %s5 = ssub.s32 1, %s3
  %s6 = scalar_select 0, %s5, %s3
  $region1: #{tpu_custom_call.1} parent=0
    #allocation2 [shape = 'u8[4096]{0}', space=vmem, size = 0x1000, scoped, tag = 'input window, operand 0, single buffered']
    #allocation3 [shape = 's32[1]{0}', space=sflag, size = 0x4, scoped, tag = 'scoped memory for tpu_custom_call.1']
    #allocation4 [shape = 's32[1]{0}', space=sflag, size = 0x4, scoped, tag = 'scoped memory for tpu_custom_call.1']
    #allocation5 [shape = 'u8[4096]{0}', space=vmem, size = 0x1000, scoped, tag = 'input window, operand 1, single buffered']
    #allocation6 [shape = 's32[1]{0}', space=sflag, size = 0x4, scoped, tag = 'scoped memory for tpu_custom_call.1']
    #allocation7 [shape = 'u8[4096]{0}', space=vmem, size = 0x1000, scoped, tag = 'output window, operand 0, single buffered']
    %7 = vsyncpa [#allocation3], 0
    %8 = vsyncpa [#allocation6], 0
    %9 = vsyncpa [#allocation4], 0
    // Predicated region
    $region2: #{tpu_custom_call.1} parent=1 // pred_check
      _
    $region3: #{tpu_custom_call.1} parent=1 // pred_check_branch
      %11 = sbr.rel (0) target = $region5
    $region4: #{tpu_custom_call.1} parent=1 // pred_region
      %s13 = ssub.s32 128, 128
      %14 = vsyncadd [#allocation3], %s13
      %s16 = sshll.u32 [#allocation2], 4
      %s17 = int_to_ptr.vmem [resolvable:$true] %s16
      %19 = dma.hbm_to_vmem [thread:$0]  %s0, 128, %s17, [#allocation3]
    $region5: #{tpu_custom_call.1} parent=1 // pred_fallthru
      _
    // Predicated region
    $region6: #{tpu_custom_call.1} parent=1 // pred_check
      _
    $region7: #{tpu_custom_call.1} parent=1 // pred_check_branch
      %21 = sbr.rel (0) target = $region9
    $region8: #{tpu_custom_call.1} parent=1 // pred_region
      %s23 = ssub.s32 128, 128
      %24 = vsyncadd [#allocation6], %s23
      %s26 = sshll.u32 [#allocation5], 4
      %s27 = int_to_ptr.vmem [resolvable:$true] %s26
      %29 = dma.hbm_to_vmem [thread:$0]  %s1, 128, %s27, [#allocation6]
    $region9: #{tpu_custom_call.1} parent=1 // pred_fallthru
      _
    // Predicated region
    $region10: #{tpu_custom_call.1} parent=1 // pred_check
      _
    $region11: #{tpu_custom_call.1} parent=1 // pred_check_branch
      %31 = sbr.rel (0) target = $region13
    $region12: #{tpu_custom_call.1} parent=1 // pred_region
      %32 = dma.done [#allocation3], 128
    $region13: #{tpu_custom_call.1} parent=1 // pred_fallthru
      _
    // Predicated region
    $region14: #{tpu_custom_call.1} parent=1 // pred_check
      _
    $region15: #{tpu_custom_call.1} parent=1 // pred_check_branch
      %34 = sbr.rel (0) target = $region17
    $region16: #{tpu_custom_call.1} parent=1 // pred_region
      %35 = dma.done [#allocation6], 128
    $region17: #{tpu_custom_call.1} parent=1 // pred_fallthru
      _
    %v36 = vld [vmem:[#allocation2] sm:$0xff]
    %v37 = vld [vmem:[#allocation5] sm:$0xff]
    %v38 = vadd.f32 %v36, %v37
    %v39 = vmul.f32 %v36, 2.0
    %v40 = vmul.f32 %v39, %v37
    %v41 = vsub.f32 %v38, %v40
    %v42 = vmul.f32 %v37, -0.5
    %v43 = vadd.f32 %v42, 0.75
    %v44 = vlog2.pop %v36
    %v45 = vmul.f32 %v44, 0.6931472
    %v46 = vmax.f32 %v45, -100.0
    %v47 = vsub.f32 1.0, %v36
    %v48 = vlog2.pop %v47
    %v49 = vmul.f32 %v48, 0.6931472
    %v50 = vmax.f32 %v49, -100.0
    %v51 = vmul.f32 %v37, %v46
    %v52 = vsub.f32 1.0, %v37
    %v53 = vmul.f32 %v52, %v50
    %v54 = vadd.f32 %v51, %v53
    %v55 = vsub.f32 0.0, %v54
    %v56 = vmul.f32 %v41, %v41
    %v57 = vmul.f32 %v55, %v43
    %v58 = vmul.f32 %v57, %v56
    %s59 = smul.u32 0, 8
    %v60 = vlaneseq
    %v61 = vshrl.u32 %v60, 7
    %v62 = vstv %s59
    %v63 = vadd.s32 %v62, %v61
    %v64 = vlaneseq
    %v65 = vand.u32 %v64, 127
    %vm66 = vcmp.lt.s32.totalorder %v63, 4
    %vm67 = vcmp.eq.s32.totalorder %v63, 4
    %vm68 = vcmp.lt.s32.totalorder %v65, 0
    %vm69 = vmand %vm67, %vm68
    %vm70 = vmor %vm66, %vm69
    %v71 = vsel %vm70, %v58, 0.0
    %v72 = vadd.f32 %v71, 0.0
    %73 = vst [vmem:[#allocation7] sm:$0xff] %v72
    // Predicated region
    $region18: #{tpu_custom_call.1} parent=1 // pred_check
      _
    $region19: #{tpu_custom_call.1} parent=1 // pred_check_branch
      %75 = sbr.rel (0) target = $region21
    $region20: #{tpu_custom_call.1} parent=1 // pred_region
      %s77 = ssub.s32 128, 128
      %78 = vsyncadd [#allocation4], %s77
      %s80 = sshll.u32 [#allocation7], 4
      %s81 = int_to_ptr.vmem [resolvable:$true] %s80
      %83 = dma.vmem_to_hbm [thread:$0]  %s81, 128, %s2, [#allocation4]
    $region21: #{tpu_custom_call.1} parent=1 // pred_fallthru
      _
    // Predicated region
    $region22: #{tpu_custom_call.1} parent=1 // pred_check
      _
    $region23: #{tpu_custom_call.1} parent=1 // pred_check_branch
      %85 = sbr.rel (0) target = $region25
    $region24: #{tpu_custom_call.1} parent=1 // pred_region
      %86 = dma.done [#allocation4], 128
    $region25: #{tpu_custom_call.1} parent=1 // pred_fallthru
      _
    %87 = vsyncpa [#allocation3], 1
    %88 = vsyncpa [#allocation6], 1
    %89 = vsyncpa [#allocation4], 1

</llo_original>
